<compile_context>
chip_gen: v6e
topology: v6e:2x2x1
jax: 0.10.0
libtpu: 0.0.40
codegen_flags: <defaults>
</compile_context>

<pallas_src>
from math import prod

import jax
import jax.numpy as jnp
from jax import lax
from jax.experimental import pallas as pl
from jax.experimental.pallas import tpu as pltpu


# ----------------------------------------------------------------------------- helpers
def _round_up(n: int, m: int) -> int:
    return ((n + m - 1) // m) * m


def _sublane_multiple(dtype) -> int:
    # f32 -> 8, bf16 -> 16, int8/fp8 -> 32 (keep sublane packing clean)
    return max(8, 32 // jnp.dtype(dtype).itemsize)


def _vmem_limit_bytes() -> int:
    # v5e/v6e: 128 MiB physical VMEM per TC, v7x: 64 MiB.  Use ~half as the
    # scoped limit so double-buffered in+out blocks always fit.
    try:
        cap = int(pltpu.get_tpu_info().vmem_capacity_bytes)
    except Exception:
        cap = 64 * 1024 * 1024
    return max(32 * 1024 * 1024, min(cap // 2, 96 * 1024 * 1024))


def _block_budget(vmem_limit: int) -> int:
    # f32 bytes of the *input* block; in + out, each double-buffered, plus the
    # f32 temporaries stay well under the scoped VMEM limit.
    return min(4 * 1024 * 1024, vmem_limit // 16)


# ----------------------------------------------------------------------------- kernels
def _rows_kernel(x_ref, o_ref):
    # normalize along the lane (last) axis of a (tm, width) block
    x = jnp.abs(x_ref[...].astype(jnp.float32))
    s = jnp.sum(x, axis=-1, keepdims=True)
    o_ref[...] = (x * pl.reciprocal(s, approx=False)).astype(o_ref.dtype)


def _make_packed_rows_kernel(width: int, packed: int):
    # k = packed // width original rows share one lane-dense kernel row; the
    # per-group sums are a matmul with a block-diagonal ones matrix (MXU slot,
    # free for this memory-bound kernel), keeping stores unmasked / 128-wide.
    def kernel(x_ref, o_ref):
        x = jnp.abs(x_ref[...].astype(jnp.float32))
        gi = lax.broadcasted_iota(jnp.int32, (packed, packed), 0) // width
        gj = lax.broadcasted_iota(jnp.int32, (packed, packed), 1) // width
        m = (gi == gj).astype(jnp.float32)
        s = jnp.dot(x, m, preferred_element_type=jnp.float32)  # segment sums
        o_ref[...] = (x * pl.reciprocal(s, approx=False)).astype(o_ref.dtype)

    return kernel


def _mid_kernel(x_ref, o_ref):
    # block (tb, R, t_inner): reduce the sublane-mapped middle axis, lanes stay
    # dense along the kept `inner` dimension.
    x = jnp.abs(x_ref[...].astype(jnp.float32))
    s = jnp.sum(x, axis=1, keepdims=True)
    o_ref[...] = (x * pl.reciprocal(s, approx=False)).astype(o_ref.dtype)


def _abssum_kernel(x_ref, s_ref):
    # global-sum accumulator (dim=None, pass 1); output block (1,1) revisited
    # every step -> stays resident in VMEM across the "arbitrary" grid axis.
    @pl.when(pl.program_id(0) == 0)
    def _():
        s_ref[...] = jnp.zeros_like(s_ref)

    x = jnp.abs(x_ref[...].astype(jnp.float32))
    part = jnp.sum(x, axis=-1, keepdims=True)           # lane reduce  -> (tm, 1)
    s_ref[...] += jnp.sum(part, axis=0, keepdims=True)  # sublane reduce -> (1, 1)


def _scale_kernel(s_ref, x_ref, o_ref):
    # dim=None, pass 2: y = |x| * (1 / total)
    inv = pl.reciprocal(s_ref[...], approx=False)        # (1, 1), broadcasts
    o_ref[...] = (jnp.abs(x_ref[...].astype(jnp.float32)) * inv).astype(o_ref.dtype)


# ----------------------------------------------------------------------------- tiled drivers
def _run_rows(x2, kernel, out_dtype, vmem_limit):
    """Row-independent kernel over a (rows, width) array, rows tiled + padded."""
    rows, width = x2.shape
    sub = _sublane_multiple(x2.dtype)
    budget = _block_budget(vmem_limit)

    cap = max(sub, (budget // (max(width, 1) * 4)) // sub * sub)
    if rows > sub:  # keep >= 2 grid steps when possible (v7x: 2 TensorCores)
        cap = min(cap, max(sub, _round_up((rows + 1) // 2, sub)))
    tm = min(cap, _round_up(rows, sub))

    rows_p = _round_up(rows, tm)
    if rows_p != rows:
        # pad with ones: padded rows normalize independently and are sliced off
        x2 = jnp.pad(x2, ((0, rows_p - rows), (0, 0)), constant_values=1)

    out = pl.pallas_call(
        kernel,
        out_shape=jax.ShapeDtypeStruct((rows_p, width), out_dtype),
        grid=(rows_p // tm,),
        in_specs=[pl.BlockSpec((tm, width), lambda i: (i, 0))],
        out_specs=pl.BlockSpec((tm, width), lambda i: (i, 0)),
        compiler_params=pltpu.CompilerParams(
            dimension_semantics=("parallel",),
            vmem_limit_bytes=vmem_limit,
        ),
    )(x2)
    return out[:rows] if rows_p != rows else out


def _normalize_last(x2, out_dtype, vmem_limit):
    """Reduction over the last axis of a 2-D (rows, width) view."""
    rows, width = x2.shape
    if 0 < width < 128 and 128 % width == 0 and rows >= (128 // width):
        # lane-dense repack: k original rows per 128-lane kernel row
        k = 128 // width
        rows_k = _round_up(rows, k)
        if rows_k != rows:
            x2 = jnp.pad(x2, ((0, rows_k - rows), (0, 0)), constant_values=1)
        x2p = x2.reshape(rows_k // k, k * width)          # pure reshape (contiguous)
        outp = _run_rows(x2p, _make_packed_rows_kernel(width, k * width),
                         out_dtype, vmem_limit)
        out = outp.reshape(rows_k, width)
        return out[:rows] if rows_k != rows else out

    return _run_rows(x2, _rows_kernel, out_dtype, vmem_limit)


def _normalize_mid(x3, out_dtype, vmem_limit):
    """Reduction over the middle axis of a (outer, R, inner) view (no transpose)."""
    outer, r, inner = x3.shape
    budget = _block_budget(vmem_limit)

    # lane tile over `inner`
    if r * inner * 4 <= budget:
        t_in, inner_p = inner, inner                      # full extent (always legal)
    else:
        t_in = max(128, (budget // (r * 4)) // 128 * 128)  # multiple of 128
        inner_p = _round_up(inner, t_in)

    # outer tile from the remaining budget
    tb = max(1, budget // max(1, r * t_in * 4))
    tb = min(tb, outer)
    if outer > 1 and tb >= outer and inner_p == t_in:
        tb = (outer + 1) // 2                             # >= 2 grid steps for v7x
    outer_p = _round_up(outer, tb)

    if outer_p != outer or inner_p != inner:
        x3 = jnp.pad(x3, ((0, outer_p - outer), (0, 0), (0, inner_p - inner)),
                     constant_values=1)

    grid = (outer_p // tb, inner_p // t_in)
    out = pl.pallas_call(
        _mid_kernel,
        out_shape=jax.ShapeDtypeStruct((outer_p, r, inner_p), out_dtype),
        grid=grid,
        in_specs=[pl.BlockSpec((tb, r, t_in), lambda i, j: (i, 0, j))],
        out_specs=pl.BlockSpec((tb, r, t_in), lambda i, j: (i, 0, j)),
        compiler_params=pltpu.CompilerParams(
            dimension_semantics=("parallel", "parallel"),
            vmem_limit_bytes=vmem_limit,
        ),
    )(x3)
    if outer_p != outer or inner_p != inner:
        out = out[:outer, :, :inner]
    return out


def _normalize_all(x, out_dtype, vmem_limit):
    """dim=None: two-pass tiled global normalization (never a single block)."""
    n = x.size
    w = 512 if n >= 512 else 128
    budget = _block_budget(vmem_limit)
    sub = _sublane_multiple(x.dtype)

    rows = pl.cdiv(n, w)
    cap = max(sub, (budget // (w * 4)) // sub * sub)
    if rows > sub:
        cap = min(cap, max(sub, _round_up((rows + 1) // 2, sub)))
    tm = min(cap, _round_up(rows, sub))
    rows_p = _round_up(rows, tm)
    n_p = rows_p * w

    flat = x.reshape(-1)
    if n_p != n:
        flat = jnp.pad(flat, (0, n_p - n))                # zeros: don't affect |x| sum
    x2 = flat.reshape(rows_p, w)
    grid = (rows_p // tm,)

    # pass 1: global sum of |x|
    total = pl.pallas_call(
        _abssum_kernel,
        out_shape=jax.ShapeDtypeStruct((1, 1), jnp.float32),
        grid=grid,
        in_specs=[pl.BlockSpec((tm, w), lambda i: (i, 0))],
        out_specs=pl.BlockSpec((1, 1), lambda i: (0, 0)),
        compiler_params=pltpu.CompilerParams(
            dimension_semantics=("arbitrary",),           # accumulator -> sequential
            vmem_limit_bytes=vmem_limit,
        ),
    )(x2)

    # pass 2: scale by the reciprocal
    out2 = pl.pallas_call(
        _scale_kernel,
        out_shape=jax.ShapeDtypeStruct((rows_p, w), out_dtype),
        grid=grid,
        in_specs=[pl.BlockSpec((1, 1), lambda i: (0, 0)),
                  pl.BlockSpec((tm, w), lambda i: (i, 0))],
        out_specs=pl.BlockSpec((tm, w), lambda i: (i, 0)),
        compiler_params=pltpu.CompilerParams(
            dimension_semantics=("parallel",),
            vmem_limit_bytes=vmem_limit,
        ),
    )(total, x2)

    out_flat = out2.reshape(-1)
    if n_p != n:
        out_flat = out_flat[:n]
    return out_flat.reshape(x.shape)


# ----------------------------------------------------------------------------- public wrapper
def probability_distribution(x: jax.Array, dim: int | None = None) -> jax.Array:
    """JAX/Pallas equivalent of ProbabilityDistribution(dim).forward(x)."""
    out_dtype = x.dtype if jnp.issubdtype(x.dtype, jnp.floating) else jnp.float32
    vmem_limit = _vmem_limit_bytes()

    if dim is None:
        return _normalize_all(x, out_dtype, vmem_limit)

    d = dim % x.ndim
    if d == x.ndim - 1:
        rows = prod(x.shape[:-1]) if x.ndim > 1 else 1
        out2 = _normalize_last(x.reshape(rows, x.shape[-1]), out_dtype, vmem_limit)
        return out2.reshape(x.shape)

    # reduce over a non-last axis: pure reshape (no HBM transpose round-trip)
    outer = prod(x.shape[:d]) if d > 0 else 1
    inner = prod(x.shape[d + 1:])
    out3 = _normalize_mid(x.reshape(outer, x.shape[d], inner), out_dtype, vmem_limit)
    return out3.reshape(x.shape)


# ----------------------------------------------------------------------------- self test
def _reference(x: jax.Array, dim: int | None) -> jax.Array:
    a = jnp.abs(x)
    if dim is None:
        return a / jnp.sum(a)
    return a / jnp.sum(a, axis=dim, keepdims=True)


if __name__ == "__main__":
    key = jax.random.PRNGKey(0)
    x = jax.random.normal(key, (2, 4, 16, 16), dtype=jnp.float32)

    # dim=None, channel dim (NCHW), last dim, leading dim, spatial dim
    for dim in (None, 1, -1, 0, 2):
        y = probability_distribution(x, dim=dim)
        jax.block_until_ready(y)
        assert y.shape == x.shape
        assert jnp.allclose(y, _reference(x, dim), rtol=1e-5, atol=1e-6), f"dim={dim}"

    # ragged shapes exercise the row/outer/inner padding paths
    x_r = jax.random.normal(jax.random.PRNGKey(1), (3, 5, 7), dtype=jnp.float32)
    for dim in (None, 0, 1, 2):
        y = probability_distribution(x_r, dim=dim)
        jax.block_until_ready(y)
        assert y.shape == x_r.shape
        assert jnp.allclose(y, _reference(x_r, dim), rtol=1e-5, atol=1e-6), f"ragged dim={dim}"

    print("KERNEL_OK")
</pallas_src>

<mosaic_0001>
module attributes {stable_mosaic.version = 11 : i64} {
  func.func @_abssum_kernel(%arg0: i32, %arg1: memref<8x512xf32, #tpu.memory_space<vmem>>, %arg2: memref<1x1xf32, #tpu.memory_space<vmem>>) attributes {dimension_semantics = [#tpu.dimension_semantics<arbitrary>], iteration_bounds = array<i64: 1>, scalar_prefetch = 0 : i64, scratch_operands = 0 : i64, tpu.core_type = #tpu.core_type<tc>, window_params = [{transform_indices = @transform_0, window_bounds = array<i64: 8, 512>}, {pipeline_mode = #tpu.pipeline_mode<synchronous>, transform_indices = @transform_1, window_bounds = array<i64: 1, 1>}]} {
    %c0_i32 = arith.constant 0 : i32
    %0 = arith.cmpi eq, %arg0, %c0_i32 : i32
    %1 = arith.extui %0 : i1 to i32
    %c0_i32_0 = arith.constant 0 : i32
    %2 = arith.cmpi ne, %1, %c0_i32_0 : i32
    scf.if %2 {
      %cst_7 = arith.constant 0.000000e+00 : f32
      %12 = vector.broadcast %cst_7 : f32 to vector<1x1xf32>
      %c0_8 = arith.constant 0 : index
      %c0_9 = arith.constant 0 : index
      %13 = vector.load %arg2[%c0_8, %c0_9] : memref<1x1xf32, #tpu.memory_space<vmem>>, vector<1x1xf32>
      tpu.vector_store %arg2[%c0_8, %c0_9], %12 {strides = array<i32>} : memref<1x1xf32, #tpu.memory_space<vmem>>, vector<1x1xf32>,
    } else {
    }
    %c0 = arith.constant 0 : index
    %c0_1 = arith.constant 0 : index
    %3 = vector.load %arg1[%c0, %c0_1] : memref<8x512xf32, #tpu.memory_space<vmem>>, vector<8x512xf32>
    %4 = math.absf %3 : vector<8x512xf32>
    %cst = arith.constant dense<0.000000e+00> : vector<8xf32>
    %5 = vector.multi_reduction <add>, %4, %cst [1] : vector<8x512xf32> to vector<8xf32>
    %6 = vector.shape_cast %5 : vector<8xf32> to vector<8x1xf32>
    %c0_2 = arith.constant 0 : index
    %c0_3 = arith.constant 0 : index
    %7 = vector.load %arg2[%c0_2, %c0_3] : memref<1x1xf32, #tpu.memory_space<vmem>>, vector<1x1xf32>
    %cst_4 = arith.constant dense<0.000000e+00> : vector<1xf32>
    %8 = vector.multi_reduction <add>, %6, %cst_4 [0] : vector<8x1xf32> to vector<1xf32>
    %9 = vector.shape_cast %8 : vector<1xf32> to vector<1x1xf32>
    %10 = arith.addf %7, %9 : vector<1x1xf32>
    %c0_5 = arith.constant 0 : index
    %c0_6 = arith.constant 0 : index
    %11 = vector.load %arg2[%c0_5, %c0_6] : memref<1x1xf32, #tpu.memory_space<vmem>>, vector<1x1xf32>
    tpu.vector_store %arg2[%c0_5, %c0_6], %10 {strides = array<i32>} : memref<1x1xf32, #tpu.memory_space<vmem>>, vector<1x1xf32>,
    return
  }
  func.func @transform_0(%arg0: i32) -> (i32, i32) {
    %c0_i32 = arith.constant 0 : i32
    %c0_i32_0 = arith.constant 0 : i32
    return %arg0, %c0_i32 : i32, i32
  }
  func.func @transform_1(%arg0: i32) -> (i32, i32) {
    %c0_i32 = arith.constant 0 : i32
    %c0_i32_0 = arith.constant 0 : i32
    %c0_i32_1 = arith.constant 0 : i32
    return %c0_i32, %c0_i32_0 : i32, i32
  }
}

</mosaic_0001>

<llo_original>
// kernel: tpu_custom_call.1
$region0: #{tpu_custom_call.1}
  #allocation0 [shape = 'u32[]', space=smem, size = 0x4, offset = 0x4, fixed_abs, tag = 'smem constant byte address 0x4 - core index']
  #allocation1 [shape = 'u32[144,128]{1,0:T(1,128)}', space=vmem, size = 0x12000, scoped, tag = 'internal scratch']
  %s0 = inlined_call_operand.hbm [shape: f32[8,512], index: 0, kind: input, shape index: {}]
  %s1 = inlined_call_operand.hbm [shape: f32[1,1], index: 1, kind: output, shape index: {}]
  %s2 = sld [smem:[#allocation0]]
  $region22: #{tpu_custom_call.1} parent=0
    _
  %s4 = ssub.s32 1, %s2
  %s5 = scalar_select 0, %s4, %s2
  $region1: #{tpu_custom_call.1} parent=0
    #allocation2 [shape = 'u8[16384]{0}', space=vmem, size = 0x4000, scoped, tag = 'input window, operand 0, single buffered']
    #allocation3 [shape = 's32[1]{0}', space=sflag, size = 0x4, scoped, tag = 'scoped memory for tpu_custom_call.1']
    #allocation4 [shape = 's32[1]{0}', space=sflag, size = 0x4, scoped, tag = 'scoped memory for tpu_custom_call.1']
    #allocation5 [shape = 'u8[512]{0}', space=vmem, size = 0x400, scoped, tag = 'output window, operand 0, single buffered']
    %6 = vsyncpa [#allocation3], 0
    %7 = vsyncpa [#allocation4], 0
    // Predicated region
    $region2: #{tpu_custom_call.1} parent=1 // pred_check
      _
    $region3: #{tpu_custom_call.1} parent=1 // pred_check_branch
      %9 = sbr.rel (0) target = $region5
    $region4: #{tpu_custom_call.1} parent=1 // pred_region
      %s11 = ssub.s32 512, 512
      %12 = vsyncadd [#allocation3], %s11
      %s14 = sshll.u32 [#allocation2], 4
      %s15 = int_to_ptr.vmem [resolvable:$true] %s14
      %17 = dma.hbm_to_vmem [thread:$0]  %s0, 512, %s15, [#allocation3]
    $region5: #{tpu_custom_call.1} parent=1 // pred_fallthru
      _
    // Predicated region
    $region6: #{tpu_custom_call.1} parent=1 // pred_check
      _
    $region7: #{tpu_custom_call.1} parent=1 // pred_check_branch
      %19 = sbr.rel (0) target = $region9
    $region8: #{tpu_custom_call.1} parent=1 // pred_region
      %20 = dma.done [#allocation3], 512
    $region9: #{tpu_custom_call.1} parent=1 // pred_fallthru
      _
    %p21 = scmp.eq.s32.totalorder 0, 0
    // Predicated region
    $region10: #{tpu_custom_call.1} parent=1 // pred_check
      %p22 = pneg %p21
    $region11: #{tpu_custom_call.1} parent=1 // pred_check_branch
      %24 = sbr.rel (%p22) target = $region13
    $region12: #{tpu_custom_call.1} parent=1 // pred_region
      %vm25 = vcmask 0
      %26 = vst.msk [vmem:[#allocation5] sm:$0x1] %vm25, 0.0
    $region13: #{tpu_custom_call.1} parent=1 // pred_fallthru
      _
    %v27 = vld [vmem:[#allocation2] sm:$0xff]
    %v28 = vld [vmem:[#allocation2 + $0x8] sm:$0xff]
    %v29 = vld [vmem:[#allocation2 + $0x10] sm:$0xff]
    %v30 = vld [vmem:[#allocation2 + $0x18] sm:$0xff]
    %v31 = vand.u32 2147483647, %v27
    %v32 = vand.u32 2147483647, %v28
    %v33 = vand.u32 2147483647, %v29
    %v34 = vand.u32 2147483647, %v30
    %v35 = vadd.f32 %v31, %v32
    %v36 = vadd.f32 %v35, %v33
    %v37 = vadd.f32 %v36, %v34
    %38 = vadd.xlane.f32.xlu0 %v37
    %v39 = vpop.xlane.xlu0 %38
    %v40 = vld [vmem:[#allocation5] sm:$0x1]
    %v41 = vrot.slane %v39, 4
    %v42 = vadd.f32 %v39, %v41
    %v43 = vrot.slane %v42, 2
    %v44 = vadd.f32 %v42, %v43
    %v45 = vrot.slane %v44, 1
    %v46 = vadd.f32 %v44, %v45
    %v47 = vadd.f32 %v40, %v46
    %vm48 = vcmask 0
    %49 = vst.msk [vmem:[#allocation5] sm:$0x1] %vm48, %v47
    // Predicated region
    $region14: #{tpu_custom_call.1} parent=1 // pred_check
      _
    $region15: #{tpu_custom_call.1} parent=1 // pred_check_branch
      %51 = sbr.rel (0) target = $region17
    $region16: #{tpu_custom_call.1} parent=1 // pred_region
      %s53 = ssub.s32 16, 16
      %54 = vsyncadd [#allocation4], %s53
      %s56 = sshll.u32 [#allocation5], 4
      %s57 = int_to_ptr.vmem [resolvable:$true] %s56
      %59 = dma.vmem_to_hbm [thread:$0]  %s57, 16, %s1, [#allocation4]
    $region17: #{tpu_custom_call.1} parent=1 // pred_fallthru
      _
    // Predicated region
    $region18: #{tpu_custom_call.1} parent=1 // pred_check
      _
    $region19: #{tpu_custom_call.1} parent=1 // pred_check_branch
      %61 = sbr.rel (0) target = $region21
    $region20: #{tpu_custom_call.1} parent=1 // pred_region
      %62 = dma.done [#allocation4], 16
    $region21: #{tpu_custom_call.1} parent=1 // pred_fallthru
      _
    %63 = vsyncpa [#allocation3], 1
    %64 = vsyncpa [#allocation4], 1

</llo_original>
